<compile_context>
chip_gen: v5e
topology: v5e:2x2
jax: 0.10.0
libtpu: 0.0.40
codegen_flags: <defaults>
</compile_context>

<pallas_src>
import math
import functools

import jax
import jax.numpy as jnp
from jax.experimental import pallas as pl
from jax.experimental.pallas import tpu as pltpu


def _round_up(x, m):
    return (x + m - 1) // m * m


def _lcm(a, b):
    return a * b // math.gcd(a, b)


# ---------------- stage 1: support = X @ W (computed once) ----------------

def _xw_kernel(x_ref, w_ref, sup_ref):
    sup_ref[...] = jnp.dot(
        x_ref[...], w_ref[...], preferred_element_type=jnp.float32
    ).astype(sup_ref.dtype)


# ---------------- stage 2: out = adj @ support + bias ----------------------

def _adj_matmul_kernel(adj_ref, sup_ref, b_ref, out_ref, acc_ref):
    k = pl.program_id(1)

    @pl.when(k == 0)
    def _():
        acc_ref[...] = jnp.zeros_like(acc_ref)

    acc_ref[...] += jnp.dot(
        adj_ref[...], sup_ref[...], preferred_element_type=jnp.float32
    )

    @pl.when(k == pl.num_programs(1) - 1)
    def _():
        out_ref[...] = (acc_ref[...] + b_ref[...]).astype(out_ref.dtype)


@functools.partial(jax.jit, static_argnames=("row_tile", "col_tile"))
def graph_convolution(x, adj, weight, bias=None, *, row_tile=256, col_tile=512):
    """Pallas implementation of GraphConvolution.forward (dense adjacency)."""
    n, in_f = x.shape
    out_f = weight.shape[1]
    out_dtype = x.dtype

    # Lane-dense output width (multiple of 128) -> full-width vector stores.
    out_pad = _round_up(out_f, 128)

    # Clamp tiles for small graphs (keep multiples of 128), and pad N so both
    # the row tile and the reduction tile divide it evenly.
    row_tile = min(row_tile, _round_up(n, 128))
    col_tile = min(col_tile, _round_up(n, 128))
    n_pad = _round_up(n, _lcm(row_tile, col_tile))

    # bf16 MXU inputs, f32 accumulation; bias stays f32 (added after the acc).
    xb = jnp.zeros((n_pad, in_f), jnp.bfloat16).at[:n, :].set(x.astype(jnp.bfloat16))
    adjb = jnp.zeros((n_pad, n_pad), jnp.bfloat16).at[:n, :n].set(adj.astype(jnp.bfloat16))
    wb = jnp.zeros((in_f, out_pad), jnp.bfloat16).at[:, :out_f].set(
        weight.astype(jnp.bfloat16)
    )
    if bias is None:
        b2 = jnp.zeros((1, out_pad), jnp.float32)
    else:
        b2 = jnp.zeros((1, out_pad), jnp.float32).at[0, :out_f].set(
            bias.astype(jnp.float32)
        )

    vmem_limit = 48 * 1024 * 1024  # stays within v7x's 64 MiB physical VMEM

    # ---- stage 1: support = X @ W (tiled over rows, done exactly once) ----
    support = pl.pallas_call(
        _xw_kernel,
        out_shape=jax.ShapeDtypeStruct((n_pad, out_pad), jnp.bfloat16),
        grid_spec=pltpu.PrefetchScalarGridSpec(
            num_scalar_prefetch=0,
            grid=(n_pad // row_tile,),
            in_specs=[
                pl.BlockSpec((row_tile, in_f), lambda i: (i, 0)),   # x row tile
                pl.BlockSpec((in_f, out_pad), lambda i: (0, 0)),    # weight (small, resident)
            ],
            out_specs=pl.BlockSpec((row_tile, out_pad), lambda i: (i, 0)),
        ),
        compiler_params=pltpu.CompilerParams(
            dimension_semantics=("parallel",),
            vmem_limit_bytes=vmem_limit,
        ),
        cost_estimate=pl.CostEstimate(
            flops=2 * n_pad * in_f * out_pad,
            transcendentals=0,
            bytes_accessed=2 * (n_pad * in_f + in_f * out_pad + n_pad * out_pad),
        ),
    )(xb, wb)

    # ---- stage 2: out = adj @ support + bias (reduction over adj columns) ----
    out_padded = pl.pallas_call(
        _adj_matmul_kernel,
        out_shape=jax.ShapeDtypeStruct((n_pad, out_pad), out_dtype),
        grid_spec=pltpu.PrefetchScalarGridSpec(
            num_scalar_prefetch=0,
            grid=(n_pad // row_tile, n_pad // col_tile),
            in_specs=[
                pl.BlockSpec((row_tile, col_tile), lambda i, k: (i, k)),  # adj tile
                pl.BlockSpec((col_tile, out_pad), lambda i, k: (k, 0)),   # support tile
                pl.BlockSpec((1, out_pad), lambda i, k: (0, 0)),          # bias
            ],
            out_specs=pl.BlockSpec((row_tile, out_pad), lambda i, k: (i, 0)),
            scratch_shapes=[pltpu.VMEM((row_tile, out_pad), jnp.float32)],
        ),
        compiler_params=pltpu.CompilerParams(
            dimension_semantics=("parallel", "arbitrary"),
            vmem_limit_bytes=vmem_limit,
        ),
        cost_estimate=pl.CostEstimate(
            flops=2 * n_pad * n_pad * out_pad,
            transcendentals=0,
            bytes_accessed=(
                n_pad * n_pad * 2                                    # adj (bf16)
                + n_pad * out_pad * 2                                # support (bf16)
                + out_pad * 4                                        # bias
                + n_pad * out_pad * jnp.dtype(out_dtype).itemsize    # output
            ),
        ),
    )(adjb, support, b2)

    return out_padded[:n, :out_f]


if __name__ == "__main__":
    # Small, deterministic problem; N deliberately NOT a multiple of the tile
    # size to exercise the padding path.
    n_nodes = 200
    in_features = 32
    out_features = 64

    key = jax.random.PRNGKey(0)
    k_x, k_adj, k_w, k_b = jax.random.split(key, 4)

    # Node features and a dense, row-normalized adjacency matrix.
    x = jax.random.normal(k_x, (n_nodes, in_features), dtype=jnp.float32)
    adj_raw = (jax.random.uniform(k_adj, (n_nodes, n_nodes)) < 0.1).astype(jnp.float32)
    adj = adj_raw + jnp.eye(n_nodes, dtype=jnp.float32)
    adj = adj / jnp.maximum(adj.sum(axis=1, keepdims=True), 1.0)

    # Parameter init mirroring reset_parameters(): uniform(-stdv, stdv),
    # stdv = 1 / sqrt(out_features).
    stdv = 1.0 / math.sqrt(out_features)
    weight = jax.random.uniform(
        k_w, (in_features, out_features), minval=-stdv, maxval=stdv, dtype=jnp.float32
    )
    bias = jax.random.uniform(
        k_b, (out_features,), minval=-stdv, maxval=stdv, dtype=jnp.float32
    )

    out = graph_convolution(x, adj, weight, bias)
    out = jax.block_until_ready(out)

    # Reference (plain JAX, f32) check of the forward semantics.  bf16 MXU
    # inputs with f32 accumulation -> relaxed tolerance.
    ref = adj @ (x @ weight) + bias
    assert out.shape == (n_nodes, out_features)
    assert jnp.allclose(out, ref, atol=2e-2, rtol=2e-2), "mismatch vs reference"

    print("KERNEL_OK")
</pallas_src>

<mosaic_0001>
module attributes {stable_mosaic.version = 11 : i64} {
  func.func @_xw_kernel(%arg0: i32, %arg1: memref<256x32xbf16, #tpu.memory_space<vmem>>, %arg2: memref<32x128xbf16, #tpu.memory_space<vmem>>, %arg3: memref<256x128xbf16, #tpu.memory_space<vmem>>) attributes {dimension_semantics = [#tpu.dimension_semantics<parallel>], iteration_bounds = array<i64: 1>, scalar_prefetch = 0 : i64, scratch_operands = 0 : i64, tpu.core_type = #tpu.core_type<tc>, window_params = [{transform_indices = @transform_0, window_bounds = array<i64: 256, 32>}, {pipeline_mode = #tpu.pipeline_mode<synchronous>, transform_indices = @transform_1, window_bounds = array<i64: 32, 128>}, {transform_indices = @transform_2, window_bounds = array<i64: 256, 128>}]} {
    %c0 = arith.constant 0 : index
    %c0_0 = arith.constant 0 : index
    %0 = vector.load %arg1[%c0, %c0_0] : memref<256x32xbf16, #tpu.memory_space<vmem>>, vector<256x32xbf16>
    %c0_1 = arith.constant 0 : index
    %c0_2 = arith.constant 0 : index
    %1 = vector.load %arg2[%c0_1, %c0_2] : memref<32x128xbf16, #tpu.memory_space<vmem>>, vector<32x128xbf16>
    %cst = arith.constant dense<0.000000e+00> : vector<256x128xf32>
    %2 = tpu.matmul %0, %1, %cst {dimension_numbers = #tpu.dot_dimension_numbers<[1], [0], [0], [1], [0, 0, 1, 1], [], []>} : vector<256x32xbf16>, vector<32x128xbf16>, vector<256x128xf32> -> vector<256x128xf32>
    %3 = arith.truncf %2 : vector<256x128xf32> to vector<256x128xbf16>
    %c0_3 = arith.constant 0 : index
    %c0_4 = arith.constant 0 : index
    %4 = vector.load %arg3[%c0_3, %c0_4] : memref<256x128xbf16, #tpu.memory_space<vmem>>, vector<256x128xbf16>
    tpu.vector_store %arg3[%c0_3, %c0_4], %3 {strides = array<i32>} : memref<256x128xbf16, #tpu.memory_space<vmem>>, vector<256x128xbf16>,
    return
  }
  func.func @transform_0(%arg0: i32) -> (i32, i32) {
    %c0_i32 = arith.constant 0 : i32
    %c0_i32_0 = arith.constant 0 : i32
    return %arg0, %c0_i32 : i32, i32
  }
  func.func @transform_1(%arg0: i32) -> (i32, i32) {
    %c0_i32 = arith.constant 0 : i32
    %c0_i32_0 = arith.constant 0 : i32
    %c0_i32_1 = arith.constant 0 : i32
    return %c0_i32, %c0_i32_0 : i32, i32
  }
  func.func @transform_2(%arg0: i32) -> (i32, i32) {
    %c0_i32 = arith.constant 0 : i32
    %c0_i32_0 = arith.constant 0 : i32
    return %arg0, %c0_i32 : i32, i32
  }
}

module attributes {stable_mosaic.version = 11 : i64} {
  func.func @_adj_matmul_kernel(%arg0: i32, %arg1: i32, %arg2: memref<256x256xbf16, #tpu.memory_space<vmem>>, %arg3: memref<256x128xbf16, #tpu.memory_space<vmem>>, %arg4: memref<1x128xf32, #tpu.memory_space<vmem>>, %arg5: memref<256x128xf32, #tpu.memory_space<vmem>>, %arg6: memref<256x128xf32, #tpu.memory_space<vmem>>) attributes {dimension_semantics = [#tpu.dimension_semantics<parallel>, #tpu.dimension_semantics<arbitrary>], iteration_bounds = array<i64: 1, 1>, scalar_prefetch = 0 : i64, scratch_operands = 1 : i64, tpu.core_type = #tpu.core_type<tc>, window_params = [{transform_indices = @transform_0, window_bounds = array<i64: 256, 256>}, {transform_indices = @transform_1, window_bounds = array<i64: 256, 128>}, {pipeline_mode = #tpu.pipeline_mode<synchronous>, transform_indices = @transform_2, window_bounds = array<i64: 1, 128>}, {transform_indices = @transform_3, window_bounds = array<i64: 256, 128>}]} {
    %c0_i32 = arith.constant 0 : i32
    %0 = arith.cmpi eq, %arg1, %c0_i32 : i32
    %1 = arith.extui %0 : i1 to i32
    %c0_i32_0 = arith.constant 0 : i32
    %2 = arith.cmpi ne, %1, %c0_i32_0 : i32
    scf.if %2 {
      %cst_10 = arith.constant 0.000000e+00 : f32
      %12 = vector.broadcast %cst_10 : f32 to vector<256x128xf32>
      %c0_11 = arith.constant 0 : index
      %c0_12 = arith.constant 0 : index
      %13 = vector.load %arg6[%c0_11, %c0_12] : memref<256x128xf32, #tpu.memory_space<vmem>>, vector<256x128xf32>
      tpu.vector_store %arg6[%c0_11, %c0_12], %12 {strides = array<i32>} : memref<256x128xf32, #tpu.memory_space<vmem>>, vector<256x128xf32>,
    } else {
    }
    %c0 = arith.constant 0 : index
    %c0_1 = arith.constant 0 : index
    %3 = vector.load %arg6[%c0, %c0_1] : memref<256x128xf32, #tpu.memory_space<vmem>>, vector<256x128xf32>
    %c0_2 = arith.constant 0 : index
    %c0_3 = arith.constant 0 : index
    %4 = vector.load %arg2[%c0_2, %c0_3] : memref<256x256xbf16, #tpu.memory_space<vmem>>, vector<256x256xbf16>
    %c0_4 = arith.constant 0 : index
    %c0_5 = arith.constant 0 : index
    %5 = vector.load %arg3[%c0_4, %c0_5] : memref<256x128xbf16, #tpu.memory_space<vmem>>, vector<256x128xbf16>
    %cst = arith.constant dense<0.000000e+00> : vector<256x128xf32>
    %6 = tpu.matmul %4, %5, %cst {dimension_numbers = #tpu.dot_dimension_numbers<[1], [0], [0], [1], [0, 0, 1, 1], [], []>} : vector<256x256xbf16>, vector<256x128xbf16>, vector<256x128xf32> -> vector<256x128xf32>
    %7 = arith.addf %3, %6 : vector<256x128xf32>
    %c0_6 = arith.constant 0 : index
    %c0_7 = arith.constant 0 : index
    %8 = vector.load %arg6[%c0_6, %c0_7] : memref<256x128xf32, #tpu.memory_space<vmem>>, vector<256x128xf32>
    tpu.vector_store %arg6[%c0_6, %c0_7], %7 {strides = array<i32>} : memref<256x128xf32, #tpu.memory_space<vmem>>, vector<256x128xf32>,
    %c0_i32_8 = arith.constant 0 : i32
    %9 = arith.cmpi eq, %arg1, %c0_i32_8 : i32
    %10 = arith.extui %9 : i1 to i32
    %c0_i32_9 = arith.constant 0 : i32
    %11 = arith.cmpi ne, %10, %c0_i32_9 : i32
    scf.if %11 {
      %c0_10 = arith.constant 0 : index
      %c0_11 = arith.constant 0 : index
      %12 = vector.load %arg6[%c0_10, %c0_11] : memref<256x128xf32, #tpu.memory_space<vmem>>, vector<256x128xf32>
      %c0_12 = arith.constant 0 : index
      %c0_13 = arith.constant 0 : index
      %13 = vector.load %arg4[%c0_12, %c0_13] : memref<1x128xf32, #tpu.memory_space<vmem>>, vector<1x128xf32>
      %14 = vector.broadcast %13 : vector<1x128xf32> to vector<256x128xf32>
      %15 = arith.addf %12, %14 : vector<256x128xf32>
      %c0_14 = arith.constant 0 : index
      %c0_15 = arith.constant 0 : index
      %16 = vector.load %arg5[%c0_14, %c0_15] : memref<256x128xf32, #tpu.memory_space<vmem>>, vector<256x128xf32>
      tpu.vector_store %arg5[%c0_14, %c0_15], %15 {strides = array<i32>} : memref<256x128xf32, #tpu.memory_space<vmem>>, vector<256x128xf32>,
    } else {
    }
    return
  }
  func.func @transform_0(%arg0: i32, %arg1: i32) -> (i32, i32) {
    %c0_i32 = arith.constant 0 : i32
    return %arg0, %arg1 : i32, i32
  }
  func.func @transform_1(%arg0: i32, %arg1: i32) -> (i32, i32) {
    %c0_i32 = arith.constant 0 : i32
    %c0_i32_0 = arith.constant 0 : i32
    return %arg1, %c0_i32 : i32, i32
  }
  func.func @transform_2(%arg0: i32, %arg1: i32) -> (i32, i32) {
    %c0_i32 = arith.constant 0 : i32
    %c0_i32_0 = arith.constant 0 : i32
    %c0_i32_1 = arith.constant 0 : i32
    return %c0_i32, %c0_i32_0 : i32, i32
  }
  func.func @transform_3(%arg0: i32, %arg1: i32) -> (i32, i32) {
    %c0_i32 = arith.constant 0 : i32
    %c0_i32_0 = arith.constant 0 : i32
    return %arg0, %c0_i32 : i32, i32
  }
}

</mosaic_0001>

<llo_original>
// kernel: graph_convolution.2
$region0: #{graph_convolution.2}
  #allocation0 [shape = 'u32[]', space=smem, size = 0x4, offset = 0x4, fixed_abs, tag = 'smem constant byte address 0x4 - core index']
  #allocation1 [shape = 'u32[72,128]{1,0:T(1,128)}', space=vmem, size = 0x9000, scoped, tag = 'internal scratch']
  %s0 = inlined_call_operand.vmem [shape: bf16[256,32], index: 0, kind: input, shape index: {}]
  %s1 = inlined_call_operand.vmem [shape: bf16[32,128], index: 1, kind: input, shape index: {}]
  %s2 = inlined_call_operand.vmem [shape: bf16[256,128], index: 2, kind: output, shape index: {}]
  %s3 = sld [smem:[#allocation0]]
  $region18: #{graph_convolution.2} parent=0
    _
  %s5 = ssub.s32 1, %s3
  %s6 = scalar_select 0, %s5, %s3
  // Predicated region
  $region2: #{graph_convolution.2} parent=0 // pred_check
    _
  $region3: #{graph_convolution.2} parent=0 // pred_check_branch
    %8 = sbr.rel (0) target = $region5
  $region4: #{graph_convolution.2} parent=0 // pred_region
    _
  $region5: #{graph_convolution.2} parent=0 // pred_fallthru
    _
  // Predicated region
  $region6: #{graph_convolution.2} parent=0 // pred_check
    _
  $region7: #{graph_convolution.2} parent=0 // pred_check_branch
    %10 = sbr.rel (0) target = $region9
  $region8: #{graph_convolution.2} parent=0 // pred_region
    _
  $region9: #{graph_convolution.2} parent=0 // pred_fallthru
    _
  %v12 = vld [vmem:[%s0] sm:$0xf]
  %v13 = vld [vmem:[%s0 + $0x4] sm:$0xf]
  %v14 = vld [vmem:[%s0 + $0x8] sm:$0xf]
  %v15 = vld [vmem:[%s0 + $0xc] sm:$0xf]
  %v16 = vld [vmem:[%s0 + $0x10] sm:$0xf]
  %v17 = vld [vmem:[%s0 + $0x14] sm:$0xf]
  %v18 = vld [vmem:[%s0 + $0x18] sm:$0xf]
  %v19 = vld [vmem:[%s0 + $0x1c] sm:$0xf]
  %v20 = vld [vmem:[%s0 + $0x20] sm:$0xf]
  %v21 = vld [vmem:[%s0 + $0x24] sm:$0xf]
  %v22 = vld [vmem:[%s0 + $0x28] sm:$0xf]
  %v23 = vld [vmem:[%s0 + $0x2c] sm:$0xf]
  %v24 = vld [vmem:[%s0 + $0x30] sm:$0xf]
  %v25 = vld [vmem:[%s0 + $0x34] sm:$0xf]
  %v26 = vld [vmem:[%s0 + $0x38] sm:$0xf]
  %v27 = vld [vmem:[%s0 + $0x3c] sm:$0xf]
  %v28 = vld [vmem:[%s0 + $0x40] sm:$0xf]
  %v29 = vld [vmem:[%s0 + $0x44] sm:$0xf]
  %v30 = vld [vmem:[%s0 + $0x48] sm:$0xf]
  %v31 = vld [vmem:[%s0 + $0x4c] sm:$0xf]
  %v32 = vld [vmem:[%s0 + $0x50] sm:$0xf]
  %v33 = vld [vmem:[%s0 + $0x54] sm:$0xf]
  %v34 = vld [vmem:[%s0 + $0x58] sm:$0xf]
  %v35 = vld [vmem:[%s0 + $0x5c] sm:$0xf]
  %v36 = vld [vmem:[%s0 + $0x60] sm:$0xf]
  %v37 = vld [vmem:[%s0 + $0x64] sm:$0xf]
  %v38 = vld [vmem:[%s0 + $0x68] sm:$0xf]
  %v39 = vld [vmem:[%s0 + $0x6c] sm:$0xf]
  %v40 = vld [vmem:[%s0 + $0x70] sm:$0xf]
  %v41 = vld [vmem:[%s0 + $0x74] sm:$0xf]
  %v42 = vld [vmem:[%s0 + $0x78] sm:$0xf]
  %v43 = vld [vmem:[%s0 + $0x7c] sm:$0xf]
  %v44 = vld [vmem:[%s1] sm:$0xf]
  %v45 = vld [vmem:[%s1 + $0x4] sm:$0xf]
  %v46 = vld [vmem:[%s1 + $0x8] sm:$0xf]
  %v47 = vld [vmem:[%s1 + $0xc] sm:$0xf]
  %v80 = vunpack.c.l.b16 %v12
  %v81 = vunpack.c.l.b16 %v13
  %v82 = vunpack.c.l.b16 %v14
  %v83 = vunpack.c.l.b16 %v15
  %v84 = vunpack.c.l.b16 %v16
  %v85 = vunpack.c.l.b16 %v17
  %v86 = vunpack.c.l.b16 %v18
  %v87 = vunpack.c.l.b16 %v19
  %v88 = vunpack.c.l.b16 %v20
  %v89 = vunpack.c.l.b16 %v21
  %v90 = vunpack.c.l.b16 %v22
  %v91 = vunpack.c.l.b16 %v23
  %v92 = vunpack.c.l.b16 %v24
  %v93 = vunpack.c.l.b16 %v25
  %v94 = vunpack.c.l.b16 %v26
  %v95 = vunpack.c.l.b16 %v27
  %v96 = vunpack.c.l.b16 %v28
  %v97 = vunpack.c.l.b16 %v29
  %v98 = vunpack.c.l.b16 %v30
  %v99 = vunpack.c.l.b16 %v31
  %v100 = vunpack.c.l.b16 %v32
  %v101 = vunpack.c.l.b16 %v33
  %v102 = vunpack.c.l.b16 %v34
  %v103 = vunpack.c.l.b16 %v35
  %v104 = vunpack.c.l.b16 %v36
  %v105 = vunpack.c.l.b16 %v37
  %v106 = vunpack.c.l.b16 %v38
  %v107 = vunpack.c.l.b16 %v39
  %v108 = vunpack.c.l.b16 %v40
  %v109 = vunpack.c.l.b16 %v41
  %v110 = vunpack.c.l.b16 %v42
  %v111 = vunpack.c.l.b16 %v43
  %v112 = vpack.c.b16 %v81, %v80
  %v113 = vpack.c.b16 %v83, %v82
  %v114 = vpack.c.b16 %v85, %v84
  %v115 = vpack.c.b16 %v87, %v86
  %v116 = vpack.c.b16 %v89, %v88
  %v117 = vpack.c.b16 %v91, %v90
  %v118 = vpack.c.b16 %v93, %v92
  %v119 = vpack.c.b16 %v95, %v94
  %v120 = vpack.c.b16 %v97, %v96
  %v121 = vpack.c.b16 %v99, %v98
  %v122 = vpack.c.b16 %v101, %v100
  %v123 = vpack.c.b16 %v103, %v102
  %v124 = vpack.c.b16 %v105, %v104
  %v125 = vpack.c.b16 %v107, %v106
  %v126 = vpack.c.b16 %v109, %v108
  %v127 = vpack.c.b16 %v111, %v110
  %v132 = vunpack.c.l.b16 %v44
  %v133 = vunpack.c.l.b16 %v45
  %v134 = vunpack.c.l.b16 %v46
  %v135 = vunpack.c.l.b16 %v47
  %v136 = vpack.c.b16 %v133, %v132
  %v137 = vpack.c.b16 %v135, %v134
  %vm140 = vcmask 261120
  %v142 = vsel %vm140, %v112, 0
  %v145 = vsel %vm140, %v113, 0
  %v148 = vsel %vm140, %v114, 0
  %v151 = vsel %vm140, %v115, 0
  %v154 = vsel %vm140, %v116, 0
  %v157 = vsel %vm140, %v117, 0
  %v160 = vsel %vm140, %v118, 0
  %v163 = vsel %vm140, %v119, 0
  %v166 = vsel %vm140, %v120, 0
  %v169 = vsel %vm140, %v121, 0
  %v172 = vsel %vm140, %v122, 0
  %v175 = vsel %vm140, %v123, 0
  %v178 = vsel %vm140, %v124, 0
  %v181 = vsel %vm140, %v125, 0
  %v184 = vsel %vm140, %v126, 0
  %v187 = vsel %vm140, %v127, 0
  %189 = vmatpush.bf16.msra.mxu0 0
  %190 = vmatpush.bf16.msra.mxu0 0
  %191 = vmatpush.bf16.msra.mxu0 0
  %192 = vmatpush.bf16.msra.mxu0 0
  %193 = vmatpush.bf16.msra.mxu0 0
  %194 = vmatpush.bf16.msra.mxu0 0
  %195 = vmatpush.bf16.msra.mxu0 %v137
  %196 = vmatpush.bf16.msra.mxu0 %v136
  %197 = vmatmul.bf16.gmra.mxu0 %v142
  %v198 = vpop.f32.mrf.mxu0
  %v199 = vadd.f32 0.0, %v198
  %v200 = vpop.f32.mrf.mxu0
  %v201 = vadd.f32 0.0, %v200
  %202 = vmatmul.bf16.gmra.mxu0 %v145
  %v203 = vpop.f32.mrf.mxu0
  %v204 = vadd.f32 0.0, %v203
  %v205 = vpop.f32.mrf.mxu0
  %v206 = vadd.f32 0.0, %v205
  %207 = vmatmul.bf16.gmra.mxu0 %v148
  %v208 = vpop.f32.mrf.mxu0
  %v209 = vadd.f32 0.0, %v208
  %v210 = vpop.f32.mrf.mxu0
  %v211 = vadd.f32 0.0, %v210
  %212 = vmatmul.bf16.gmra.mxu0 %v151
  %v213 = vpop.f32.mrf.mxu0
  %v214 = vadd.f32 0.0, %v213
  %v215 = vpop.f32.mrf.mxu0
  %v216 = vadd.f32 0.0, %v215
  %217 = vmatmul.bf16.gmra.mxu0 %v154
  %v218 = vpop.f32.mrf.mxu0
  %v219 = vadd.f32 0.0, %v218
  %v220 = vpop.f32.mrf.mxu0
  %v221 = vadd.f32 0.0, %v220
  %222 = vmatmul.bf16.gmra.mxu0 %v157
  %v223 = vpop.f32.mrf.mxu0
  %v224 = vadd.f32 0.0, %v223
  %v225 = vpop.f32.mrf.mxu0
  %v226 = vadd.f32 0.0, %v225
  %227 = vmatmul.bf16.gmra.mxu0 %v160
  %v228 = vpop.f32.mrf.mxu0
  %v229 = vadd.f32 0.0, %v228
  %v230 = vpop.f32.mrf.mxu0
  %v231 = vadd.f32 0.0, %v230
  %232 = vmatmul.bf16.gmra.mxu0 %v163
  %v233 = vpop.f32.mrf.mxu0
  %v234 = vadd.f32 0.0, %v233
  %v235 = vpop.f32.mrf.mxu0
  %v236 = vadd.f32 0.0, %v235
  %237 = vmatmul.bf16.gmra.mxu0 %v166
  %v238 = vpop.f32.mrf.mxu0
  %v239 = vadd.f32 0.0, %v238
  %v240 = vpop.f32.mrf.mxu0
  %v241 = vadd.f32 0.0, %v240
  %242 = vmatmul.bf16.gmra.mxu0 %v169
  %v243 = vpop.f32.mrf.mxu0
  %v244 = vadd.f32 0.0, %v243
  %v245 = vpop.f32.mrf.mxu0
  %v246 = vadd.f32 0.0, %v245
  %247 = vmatmul.bf16.gmra.mxu0 %v172
  %v248 = vpop.f32.mrf.mxu0
  %v249 = vadd.f32 0.0, %v248
  %v250 = vpop.f32.mrf.mxu0
  %v251 = vadd.f32 0.0, %v250
  %252 = vmatmul.bf16.gmra.mxu0 %v175
  %v253 = vpop.f32.mrf.mxu0
  %v254 = vadd.f32 0.0, %v253
  %v255 = vpop.f32.mrf.mxu0
  %v256 = vadd.f32 0.0, %v255
  %257 = vmatmul.bf16.gmra.mxu0 %v178
  %v258 = vpop.f32.mrf.mxu0
  %v259 = vadd.f32 0.0, %v258
  %v260 = vpop.f32.mrf.mxu0
  %v261 = vadd.f32 0.0, %v260
  %262 = vmatmul.bf16.gmra.mxu0 %v181
  %v263 = vpop.f32.mrf.mxu0
  %v264 = vadd.f32 0.0, %v263
  %v265 = vpop.f32.mrf.mxu0
  %v266 = vadd.f32 0.0, %v265
  %267 = vmatmul.bf16.gmra.mxu0 %v184
  %v268 = vpop.f32.mrf.mxu0
  %v269 = vadd.f32 0.0, %v268
  %v270 = vpop.f32.mrf.mxu0
  %v271 = vadd.f32 0.0, %v270
  %272 = vmatmul.bf16.gmra.mxu0 %v187
  %v273 = vpop.f32.mrf.mxu0
  %v274 = vadd.f32 0.0, %v273
  %v275 = vpop.f32.mrf.mxu0
  %v276 = vadd.f32 0.0, %v275
  %277 = vdwg.mxu0
  %v278 = vpack.c.bf16 %v199, %v199
  %v279 = vpack.c.bf16 %v201, %v201
  %v280 = vpack.c.bf16 %v204, %v204
  %v281 = vpack.c.bf16 %v206, %v206
  %v282 = vpack.c.bf16 %v209, %v209
  %v283 = vpack.c.bf16 %v211, %v211
  %v284 = vpack.c.bf16 %v214, %v214
  %v285 = vpack.c.bf16 %v216, %v216
  %v286 = vpack.c.bf16 %v219, %v219
  %v287 = vpack.c.bf16 %v221, %v221
  %v288 = vpack.c.bf16 %v224, %v224
  %v289 = vpack.c.bf16 %v226, %v226
  %v290 = vpack.c.bf16 %v229, %v229
  %v291 = vpack.c.bf16 %v231, %v231
  %v292 = vpack.c.bf16 %v234, %v234
  %v293 = vpack.c.bf16 %v236, %v236
  %v294 = vpack.c.bf16 %v239, %v239
  %v295 = vpack.c.bf16 %v241, %v241
  %v296 = vpack.c.bf16 %v244, %v244
  %v297 = vpack.c.bf16 %v246, %v246
  %v298 = vpack.c.bf16 %v249, %v249
  %v299 = vpack.c.bf16 %v251, %v251
  %v300 = vpack.c.bf16 %v254, %v254
  %v301 = vpack.c.bf16 %v256, %v256
  %v302 = vpack.c.bf16 %v259, %v259
  %v303 = vpack.c.bf16 %v261, %v261
  %v304 = vpack.c.bf16 %v264, %v264
  %v305 = vpack.c.bf16 %v266, %v266
  %v306 = vpack.c.bf16 %v269, %v269
  %v307 = vpack.c.bf16 %v271, %v271
  %v308 = vpack.c.bf16 %v274, %v274
  %v309 = vpack.c.bf16 %v276, %v276
  %310 = vst [vmem:[%s2] sm:$0xf] %v278
  %311 = vst [vmem:[%s2 + $0x4] sm:$0xf] %v279
  %312 = vst [vmem:[%s2 + $0x8] sm:$0xf] %v280
  %313 = vst [vmem:[%s2 + $0xc] sm:$0xf] %v281
  %314 = vst [vmem:[%s2 + $0x10] sm:$0xf] %v282
  %315 = vst [vmem:[%s2 + $0x14] sm:$0xf] %v283
  %316 = vst [vmem:[%s2 + $0x18] sm:$0xf] %v284
  %317 = vst [vmem:[%s2 + $0x1c] sm:$0xf] %v285
  %318 = vst [vmem:[%s2 + $0x20] sm:$0xf] %v286
  %319 = vst [vmem:[%s2 + $0x24] sm:$0xf] %v287
  %320 = vst [vmem:[%s2 + $0x28] sm:$0xf] %v288
  %321 = vst [vmem:[%s2 + $0x2c] sm:$0xf] %v289
  %322 = vst [vmem:[%s2 + $0x30] sm:$0xf] %v290
  %323 = vst [vmem:[%s2 + $0x34] sm:$0xf] %v291
  %324 = vst [vmem:[%s2 + $0x38] sm:$0xf] %v292
  %325 = vst [vmem:[%s2 + $0x3c] sm:$0xf] %v293
  %326 = vst [vmem:[%s2 + $0x40] sm:$0xf] %v294
  %327 = vst [vmem:[%s2 + $0x44] sm:$0xf] %v295
  %328 = vst [vmem:[%s2 + $0x48] sm:$0xf] %v296
  %329 = vst [vmem:[%s2 + $0x4c] sm:$0xf] %v297
  %330 = vst [vmem:[%s2 + $0x50] sm:$0xf] %v298
  %331 = vst [vmem:[%s2 + $0x54] sm:$0xf] %v299
  %332 = vst [vmem:[%s2 + $0x58] sm:$0xf] %v300
  %333 = vst [vmem:[%s2 + $0x5c] sm:$0xf] %v301
  %334 = vst [vmem:[%s2 + $0x60] sm:$0xf] %v302
  %335 = vst [vmem:[%s2 + $0x64] sm:$0xf] %v303
  %336 = vst [vmem:[%s2 + $0x68] sm:$0xf] %v304
  %337 = vst [vmem:[%s2 + $0x6c] sm:$0xf] %v305
  %338 = vst [vmem:[%s2 + $0x70] sm:$0xf] %v306
  %339 = vst [vmem:[%s2 + $0x74] sm:$0xf] %v307
  %340 = vst [vmem:[%s2 + $0x78] sm:$0xf] %v308
  %341 = vst [vmem:[%s2 + $0x7c] sm:$0xf] %v309
  // Predicated region
  $region10: #{graph_convolution.2} parent=0 // pred_check
    _
  $region11: #{graph_convolution.2} parent=0 // pred_check_branch
    %343 = sbr.rel (0) target = $region13
  $region12: #{graph_convolution.2} parent=0 // pred_region
    _
  $region13: #{graph_convolution.2} parent=0 // pred_fallthru
    _
  // Predicated region
  $region14: #{graph_convolution.2} parent=0 // pred_check
    _
  $region15: #{graph_convolution.2} parent=0 // pred_check_branch
    %345 = sbr.rel (0) target = $region17
  $region16: #{graph_convolution.2} parent=0 // pred_region
    _
  $region17: #{graph_convolution.2} parent=0 // pred_fallthru
    _

// kernel: graph_convolution.3
$region0: #{graph_convolution.3}
  #allocation0 [shape = 'u32[]', space=smem, size = 0x4, offset = 0x4, fixed_abs, tag = 'smem constant byte address 0x4 - core index']
  #allocation1 [shape = 'u32[72,128]{1,0:T(1,128)}', space=vmem, size = 0x9000, scoped, tag = 'internal scratch']
  #allocation2 [shape = 'f32[256,128]{1,0:T(8,128)}', space=vmem, size = 0x20000, scoped, tag = 'scratch operand']
  %s0 = inlined_call_operand.vmem [shape: bf16[256,256], index: 0, kind: input, shape index: {}]
  %s1 = inlined_call_operand.vmem [shape: bf16[256,128], index: 1, kind: input, shape index: {}]
  %s2 = inlined_call_operand.vmem [shape: f32[1,128], index: 2, kind: input, shape index: {}]
  %s3 = inlined_call_operand.vmem [shape: f32[256,128], index: 3, kind: output, shape index: {}]
  %s4 = sld [smem:[#allocation0]]
  $region30: #{graph_convolution.3} parent=0
    _
  %s6 = ssub.s32 1, %s4
  %s7 = scalar_select 0, %s6, %s4
  // Predicated region
  $region2: #{graph_convolution.3} parent=0 // pred_check
    _
  $region3: #{graph_convolution.3} parent=0 // pred_check_branch
    %9 = sbr.rel (0) target = $region5
  $region4: #{graph_convolution.3} parent=0 // pred_region
    _
  $region5: #{graph_convolution.3} parent=0 // pred_fallthru
    _
  // Predicated region
  $region6: #{graph_convolution.3} parent=0 // pred_check
    _
  $region7: #{graph_convolution.3} parent=0 // pred_check_branch
    %11 = sbr.rel (0) target = $region9
  $region8: #{graph_convolution.3} parent=0 // pred_region
    _
  $region9: #{graph_convolution.3} parent=0 // pred_fallthru
    _
  // Predicated region
  $region10: #{graph_convolution.3} parent=0 // pred_check
    _
  $region11: #{graph_convolution.3} parent=0 // pred_check_branch
    %13 = sbr.rel (0) target = $region13
  $region12: #{graph_convolution.3} parent=0 // pred_region
    _
  $region13: #{graph_convolution.3} parent=0 // pred_fallthru
    _
  %p14 = scmp.eq.s32.totalorder 0, 0
  // Predicated region
  $region14: #{graph_convolution.3} parent=0 // pred_check
    %p15 = pneg %p14
  $region15: #{graph_convolution.3} parent=0 // pred_check_branch
    %17 = sbr.rel (%p15) target = $region17
  $region16: #{graph_convolution.3} parent=0 // pred_region
    %18 = vst [vmem:[#allocation2] sm:$0xff] 0.0
    %19 = vst [vmem:[#allocation2 + $0x8] sm:$0xff] 0.0
    %20 = vst [vmem:[#allocation2 + $0x10] sm:$0xff] 0.0
    %21 = vst [vmem:[#allocation2 + $0x18] sm:$0xff] 0.0
    %22 = vst [vmem:[#allocation2 + $0x20] sm:$0xff] 0.0
    %23 = vst [vmem:[#allocation2 + $0x28] sm:$0xff] 0.0
    %24 = vst [vmem:[#allocation2 + $0x30] sm:$0xff] 0.0
    %25 = vst [vmem:[#allocation2 + $0x38] sm:$0xff] 0.0
    %26 = vst [vmem:[#allocation2 + $0x40] sm:$0xff] 0.0
    %27 = vst [vmem:[#allocation2 + $0x48] sm:$0xff] 0.0
    %28 = vst [vmem:[#allocation2 + $0x50] sm:$0xff] 0.0
    %29 = vst [vmem:[#allocation2 + $0x58] sm:$0xff] 0.0
    %30 = vst [vmem:[#allocation2 + $0x60] sm:$0xff] 0.0
    %31 = vst [vmem:[#allocation2 + $0x68] sm:$0xff] 0.0
    %32 = vst [vmem:[#allocation2 + $0x70] sm:$0xff] 0.0
    %33 = vst [vmem:[#allocation2 + $0x78] sm:$0xff] 0.0
    %34 = vst [vmem:[#allocation2 + $0x80] sm:$0xff] 0.0
    %35 = vst [vmem:[#allocation2 + $0x88] sm:$0xff] 0.0
    %36 = vst [vmem:[#allocation2 + $0x90] sm:$0xff] 0.0
    %37 = vst [vmem:[#allocation2 + $0x98] sm:$0xff] 0.0
    %38 = vst [vmem:[#allocation2 + $0xa0] sm:$0xff] 0.0
    %39 = vst [vmem:[#allocation2 + $0xa8] sm:$0xff] 0.0
    %40 = vst [vmem:[#allocation2 + $0xb0] sm:$0xff] 0.0
    %41 = vst [vmem:[#allocation2 + $0xb8] sm:$0xff] 0.0
    %42 = vst [vmem:[#allocation2 + $0xc0] sm:$0xff] 0.0
    %43 = vst [vmem:[#allocation2 + $0xc8] sm:$0xff] 0.0
    %44 = vst [vmem:[#allocation2 + $0xd0] sm:$0xff] 0.0
    %45 = vst [vmem:[#allocation2 + $0xd8] sm:$0xff] 0.0
    %46 = vst [vmem:[#allocation2 + $0xe0] sm:$0xff] 0.0
    %47 = vst [vmem:[#allocation2 + $0xe8] sm:$0xff] 0.0
    %48 = vst [vmem:[#allocation2 + $0xf0] sm:$0xff] 0.0
    %49 = vst [vmem:[#allocation2 + $0xf8] sm:$0xff] 0.0
  $region17: #{graph_convolution.3} parent=0 // pred_fallthru
    _
  %v50 = vld [vmem:[#allocation2] sm:$0xff]
  %v51 = vld [vmem:[#allocation2 + $0x8] sm:$0xff]
  %v52 = vld [vmem:[#allocation2 + $0x10] sm:$0xff]
  %v53 = vld [vmem:[#allocation2 + $0x18] sm:$0xff]
  %v54 = vld [vmem:[#allocation2 + $0x20] sm:$0xff]
  %v55 = vld [vmem:[#allocation2 + $0x28] sm:$0xff]
  %v56 = vld [vmem:[#allocation2 + $0x30] sm:$0xff]
  %v57 = vld [vmem:[#allocation2 + $0x38] sm:$0xff]
  %v58 = vld [vmem:[#allocation2 + $0x40] sm:$0xff]
  %v59 = vld [vmem:[#allocation2 + $0x48] sm:$0xff]
  %v60 = vld [vmem:[#allocation2 + $0x50] sm:$0xff]
  %v61 = vld [vmem:[#allocation2 + $0x58] sm:$0xff]
  %v62 = vld [vmem:[#allocation2 + $0x60] sm:$0xff]
  %v63 = vld [vmem:[#allocation2 + $0x68] sm:$0xff]
  %v64 = vld [vmem:[#allocation2 + $0x70] sm:$0xff]
  %v65 = vld [vmem:[#allocation2 + $0x78] sm:$0xff]
  %v66 = vld [vmem:[#allocation2 + $0x80] sm:$0xff]
  %v67 = vld [vmem:[#allocation2 + $0x88] sm:$0xff]
  %v68 = vld [vmem:[#allocation2 + $0x90] sm:$0xff]
  %v69 = vld [vmem:[#allocation2 + $0x98] sm:$0xff]
  %v70 = vld [vmem:[#allocation2 + $0xa0] sm:$0xff]
  %v71 = vld [vmem:[#allocation2 + $0xa8] sm:$0xff]
  %v72 = vld [vmem:[#allocation2 + $0xb0] sm:$0xff]
  %v73 = vld [vmem:[#allocation2 + $0xb8] sm:$0xff]
  %v74 = vld [vmem:[#allocation2 + $0xc0] sm:$0xff]
  %v75 = vld [vmem:[#allocation2 + $0xc8] sm:$0xff]
  %v76 = vld [vmem:[#allocation2 + $0xd0] sm:$0xff]
  %v77 = vld [vmem:[#allocation2 + $0xd8] sm:$0xff]
  %v78 = vld [vmem:[#allocation2 + $0xe0] sm:$0xff]
  %v79 = vld [vmem:[#allocation2 + $0xe8] sm:$0xff]
  %v80 = vld [vmem:[#allocation2 + $0xf0] sm:$0xff]
  %v81 = vld [vmem:[#allocation2 + $0xf8] sm:$0xff]
  %v82 = vld [vmem:[%s0] sm:$0xff]
  %v83 = vld [vmem:[%s0 + $0x8] sm:$0xff]
  %v84 = vld [vmem:[%s0 + $0x10] sm:$0xff]
  %v85 = vld [vmem:[%s0 + $0x18] sm:$0xff]
  %v86 = vld [vmem:[%s0 + $0x20] sm:$0xff]
  %v87 = vld [vmem:[%s0 + $0x28] sm:$0xff]
  %v88 = vld [vmem:[%s0 + $0x30] sm:$0xff]
  %v89 = vld [vmem:[%s0 + $0x38] sm:$0xff]
  %v90 = vld [vmem:[%s0 + $0x40] sm:$0xff]
  %v91 = vld [vmem:[%s0 + $0x48] sm:$0xff]
  %v92 = vld [vmem:[%s0 + $0x50] sm:$0xff]
  %v93 = vld [vmem:[%s0 + $0x58] sm:$0xff]
  %v94 = vld [vmem:[%s0 + $0x60] sm:$0xff]
  %v95 = vld [vmem:[%s0 + $0x68] sm:$0xff]
  %v96 = vld [vmem:[%s0 + $0x70] sm:$0xff]
  %v97 = vld [vmem:[%s0 + $0x78] sm:$0xff]
  %v98 = vld [vmem:[%s0 + $0x80] sm:$0xff]
  %v99 = vld [vmem:[%s0 + $0x88] sm:$0xff]
  %v100 = vld [vmem:[%s0 + $0x90] sm:$0xff]
  %v101 = vld [vmem:[%s0 + $0x98] sm:$0xff]
  %v102 = vld [vmem:[%s0 + $0xa0] sm:$0xff]
  %v103 = vld [vmem:[%s0 + $0xa8] sm:$0xff]
  %v104 = vld [vmem:[%s0 + $0xb0] sm:$0xff]
  %v105 = vld [vmem:[%s0 + $0xb8] sm:$0xff]
  %v106 = vld [vmem:[%s0 + $0xc0] sm:$0xff]
  %v107 = vld [vmem:[%s0 + $0xc8] sm:$0xff]
  %v108 = vld [vmem:[%s0 + $0xd0] sm:$0xff]
  %v109 = vld [vmem:[%s0 + $0xd8] sm:$0xff]
  %v110 = vld [vmem:[%s0 + $0xe0] sm:$0xff]
  %v111 = vld [vmem:[%s0 + $0xe8] sm:$0xff]
  %v112 = vld [vmem:[%s0 + $0xf0] sm:$0xff]
  %v113 = vld [vmem:[%s0 + $0xf8] sm:$0xff]
  %v114 = vld [vmem:[%s1] sm:$0xf]
  %v115 = vld [vmem:[%s1 + $0x4] sm:$0xf]
  %v116 = vld [vmem:[%s1 + $0x8] sm:$0xf]
  %v117 = vld [vmem:[%s1 + $0xc] sm:$0xf]
  %v118 = vld [vmem:[%s1 + $0x10] sm:$0xf]
  %v119 = vld [vmem:[%s1 + $0x14] sm:$0xf]
  %v120 = vld [vmem:[%s1 + $0x18] sm:$0xf]
  %v121 = vld [vmem:[%s1 + $0x1c] sm:$0xf]
  %v122 = vld [vmem:[%s1 + $0x20] sm:$0xf]
  %v123 = vld [vmem:[%s1 + $0x24] sm:$0xf]
  %v124 = vld [vmem:[%s1 + $0x28] sm:$0xf]
  %v125 = vld [vmem:[%s1 + $0x2c] sm:$0xf]
  %v126 = vld [vmem:[%s1 + $0x30] sm:$0xf]
  %v127 = vld [vmem:[%s1 + $0x34] sm:$0xf]
  %v128 = vld [vmem:[%s1 + $0x38] sm:$0xf]
  %v129 = vld [vmem:[%s1 + $0x3c] sm:$0xf]
  %v130 = vld [vmem:[%s1 + $0x40] sm:$0xf]
  %v131 = vld [vmem:[%s1 + $0x44] sm:$0xf]
  %v132 = vld [vmem:[%s1 + $0x48] sm:$0xf]
  %v133 = vld [vmem:[%s1 + $0x4c] sm:$0xf]
  %v134 = vld [vmem:[%s1 + $0x50] sm:$0xf]
  %v135 = vld [vmem:[%s1 + $0x54] sm:$0xf]
  %v136 = vld [vmem:[%s1 + $0x58] sm:$0xf]
  %v137 = vld [vmem:[%s1 + $0x5c] sm:$0xf]
  %v138 = vld [vmem:[%s1 + $0x60] sm:$0xf]
  %v139 = vld [vmem:[%s1 + $0x64] sm:$0xf]
  %v140 = vld [vmem:[%s1 + $0x68] sm:$0xf]
  %v141 = vld [vmem:[%s1 + $0x6c] sm:$0xf]
  %v142 = vld [vmem:[%s1 + $0x70] sm:$0xf]
  %v143 = vld [vmem:[%s1 + $0x74] sm:$0xf]
  %v144 = vld [vmem:[%s1 + $0x78] sm:$0xf]
  %v145 = vld [vmem:[%s1 + $0x7c] sm:$0xf]
  %v178 = vunpack.c.l.b16 %v82
  %v179 = vunpack.c.h.b16 %v82
  %v180 = vunpack.c.l.b16 %v83
  %v181 = vunpack.c.h.b16 %v83
  %v182 = vunpack.c.l.b16 %v84
  %v183 = vunpack.c.h.b16 %v84
  %v184 = vunpack.c.l.b16 %v85
  %v185 = vunpack.c.h.b16 %v85
  %v186 = vunpack.c.l.b16 %v86
  %v187 = vunpack.c.h.b16 %v86
  %v188 = vunpack.c.l.b16 %v87
  %v189 = vunpack.c.h.b16 %v87
  %v190 = vunpack.c.l.b16 %v88
  %v191 = vunpack.c.h.b16 %v88
  %v192 = vunpack.c.l.b16 %v89
  %v193 = vunpack.c.h.b16 %v89
  %v194 = vunpack.c.l.b16 %v90
  %v195 = vunpack.c.h.b16 %v90
  %v196 = vunpack.c.l.b16 %v91
  %v197 = vunpack.c.h.b16 %v91
  %v198 = vunpack.c.l.b16 %v92
  %v199 = vunpack.c.h.b16 %v92
  %v200 = vunpack.c.l.b16 %v93
  %v201 = vunpack.c.h.b16 %v93
  %v202 = vunpack.c.l.b16 %v94
  %v203 = vunpack.c.h.b16 %v94
  %v204 = vunpack.c.l.b16 %v95
  %v205 = vunpack.c.h.b16 %v95
  %v206 = vunpack.c.l.b16 %v96
  %v207 = vunpack.c.h.b16 %v96
  %v208 = vunpack.c.l.b16 %v97
  %v209 = vunpack.c.h.b16 %v97
  %v210 = vunpack.c.l.b16 %v98
  %v211 = vunpack.c.h.b16 %v98
  %v212 = vunpack.c.l.b16 %v99
  %v213 = vunpack.c.h.b16 %v99
  %v214 = vunpack.c.l.b16 %v100
  %v215 = vunpack.c.h.b16 %v100
  %v216 = vunpack.c.l.b16 %v101
  %v217 = vunpack.c.h.b16 %v101
  %v218 = vunpack.c.l.b16 %v102
  %v219 = vunpack.c.h.b16 %v102
  %v220 = vunpack.c.l.b16 %v103
  %v221 = vunpack.c.h.b16 %v103
  %v222 = vunpack.c.l.b16 %v104
  %v223 = vunpack.c.h.b16 %v104
  %v224 = vunpack.c.l.b16 %v105
  %v225 = vunpack.c.h.b16 %v105
  %v226 = vunpack.c.l.b16 %v106
  %v227 = vunpack.c.h.b16 %v106
  %v228 = vunpack.c.l.b16 %v107
  %v229 = vunpack.c.h.b16 %v107
  %v230 = vunpack.c.l.b16 %v108
  %v231 = vunpack.c.h.b16 %v108
  %v232 = vunpack.c.l.b16 %v109
  %v233 = vunpack.c.h.b16 %v109
  %v234 = vunpack.c.l.b16 %v110
  %v235 = vunpack.c.h.b16 %v110
  %v236 = vunpack.c.l.b16 %v111
  %v237 = vunpack.c.h.b16 %v111
  %v238 = vunpack.c.l.b16 %v112
  %v239 = vunpack.c.h.b16 %v112
  %v240 = vunpack.c.l.b16 %v113
  %v241 = vunpack.c.h.b16 %v113
  %v242 = vpack.c.b16 %v180, %v178
  %v243 = vpack.c.b16 %v181, %v179
  %v244 = vpack.c.b16 %v184, %v182
  %v245 = vpack.c.b16 %v185, %v183
  %v246 = vpack.c.b16 %v188, %v186
  %v247 = vpack.c.b16 %v189, %v187
  %v248 = vpack.c.b16 %v192, %v190
  %v249 = vpack.c.b16 %v193, %v191
  %v250 = vpack.c.b16 %v196, %v194
  %v251 = vpack.c.b16 %v197, %v195
  %v252 = vpack.c.b16 %v200, %v198
  %v253 = vpack.c.b16 %v201, %v199
  %v254 = vpack.c.b16 %v204, %v202
  %v255 = vpack.c.b16 %v205, %v203
  %v256 = vpack.c.b16 %v208, %v206
  %v257 = vpack.c.b16 %v209, %v207
  %v258 = vpack.c.b16 %v212, %v210
  %v259 = vpack.c.b16 %v213, %v211
  %v260 = vpack.c.b16 %v216, %v214
  %v261 = vpack.c.b16 %v217, %v215
  %v262 = vpack.c.b16 %v220, %v218
  %v263 = vpack.c.b16 %v221, %v219
  %v264 = vpack.c.b16 %v224, %v222
  %v265 = vpack.c.b16 %v225, %v223
  %v266 = vpack.c.b16 %v228, %v226
  %v267 = vpack.c.b16 %v229, %v227
  %v268 = vpack.c.b16 %v232, %v230
  %v269 = vpack.c.b16 %v233, %v231
  %v270 = vpack.c.b16 %v236, %v234
  %v271 = vpack.c.b16 %v237, %v235
  %v272 = vpack.c.b16 %v240, %v238
  %v273 = vpack.c.b16 %v241, %v239
  %v338 = vunpack.c.l.b16 %v114
  %v339 = vunpack.c.l.b16 %v115
  %v340 = vunpack.c.l.b16 %v116
  %v341 = vunpack.c.l.b16 %v117
  %v342 = vunpack.c.l.b16 %v118
  %v343 = vunpack.c.l.b16 %v119
  %v344 = vunpack.c.l.b16 %v120
  %v345 = vunpack.c.l.b16 %v121
  %v346 = vunpack.c.l.b16 %v122
  %v347 = vunpack.c.l.b16 %v123
  %v348 = vunpack.c.l.b16 %v124
  %v349 = vunpack.c.l.b16 %v125
  %v350 = vunpack.c.l.b16 %v126
  %v351 = vunpack.c.l.b16 %v127
  %v352 = vunpack.c.l.b16 %v128
  %v353 = vunpack.c.l.b16 %v129
  %v354 = vunpack.c.l.b16 %v130
  %v355 = vunpack.c.l.b16 %v131
  %v356 = vunpack.c.l.b16 %v132
  %v357 = vunpack.c.l.b16 %v133
  %v358 = vunpack.c.l.b16 %v134
  %v359 = vunpack.c.l.b16 %v135
  %v360 = vunpack.c.l.b16 %v136
  %v361 = vunpack.c.l.b16 %v137
  %v362 = vunpack.c.l.b16 %v138
  %v363 = vunpack.c.l.b16 %v139
  %v364 = vunpack.c.l.b16 %v140
  %v365 = vunpack.c.l.b16 %v141
  %v366 = vunpack.c.l.b16 %v142
  %v367 = vunpack.c.l.b16 %v143
  %v368 = vunpack.c.l.b16 %v144
  %v369 = vunpack.c.l.b16 %v145
  %v370 = vpack.c.b16 %v339, %v338
  %v371 = vpack.c.b16 %v341, %v340
  %v372 = vpack.c.b16 %v343, %v342
  %v373 = vpack.c.b16 %v345, %v344
  %v374 = vpack.c.b16 %v347, %v346
  %v375 = vpack.c.b16 %v349, %v348
  %v376 = vpack.c.b16 %v351, %v350
  %v377 = vpack.c.b16 %v353, %v352
  %v378 = vpack.c.b16 %v355, %v354
  %v379 = vpack.c.b16 %v357, %v356
  %v380 = vpack.c.b16 %v359, %v358
  %v381 = vpack.c.b16 %v361, %v360
  %v382 = vpack.c.b16 %v363, %v362
  %v383 = vpack.c.b16 %v365, %v364
  %v384 = vpack.c.b16 %v367, %v366
  %v385 = vpack.c.b16 %v369, %v368
  %402 = vmatpush.bf16.msra.mxu0 %v377
  %403 = vmatpush.bf16.msra.mxu0 %v376
  %404 = vmatpush.bf16.msra.mxu0 %v375
  %405 = vmatpush.bf16.msra.mxu0 %v374
  %406 = vmatpush.bf16.msra.mxu0 %v373
  %407 = vmatpush.bf16.msra.mxu0 %v372
  %408 = vmatpush.bf16.msra.mxu0 %v371
  %409 = vmatpush.bf16.msra.mxu0 %v370
  %410 = vmatmul.bf16.gmra.mxu0 %v242
  %v411 = vpop.f32.mrf.mxu0
  %v412 = vadd.f32 0.0, %v411
  %v413 = vpop.f32.mrf.mxu0
  %v414 = vadd.f32 0.0, %v413
  %415 = vmatmul.bf16.gmra.mxu0 %v244
  %v416 = vpop.f32.mrf.mxu0
  %v417 = vadd.f32 0.0, %v416
  %v418 = vpop.f32.mrf.mxu0
  %v419 = vadd.f32 0.0, %v418
  %420 = vmatmul.bf16.gmra.mxu0 %v246
  %v421 = vpop.f32.mrf.mxu0
  %v422 = vadd.f32 0.0, %v421
  %v423 = vpop.f32.mrf.mxu0
  %v424 = vadd.f32 0.0, %v423
  %425 = vmatmul.bf16.gmra.mxu0 %v248
  %v426 = vpop.f32.mrf.mxu0
  %v427 = vadd.f32 0.0, %v426
  %v428 = vpop.f32.mrf.mxu0
  %v429 = vadd.f32 0.0, %v428
  %430 = vmatmul.bf16.gmra.mxu0 %v250
  %v431 = vpop.f32.mrf.mxu0
  %v432 = vadd.f32 0.0, %v431
  %v433 = vpop.f32.mrf.mxu0
  %v434 = vadd.f32 0.0, %v433
  %435 = vmatmul.bf16.gmra.mxu0 %v252
  %v436 = vpop.f32.mrf.mxu0
  %v437 = vadd.f32 0.0, %v436
  %v438 = vpop.f32.mrf.mxu0
  %v439 = vadd.f32 0.0, %v438
  %440 = vmatmul.bf16.gmra.mxu0 %v254
  %v441 = vpop.f32.mrf.mxu0
  %v442 = vadd.f32 0.0, %v441
  %v443 = vpop.f32.mrf.mxu0
  %v444 = vadd.f32 0.0, %v443
  %445 = vmatmul.bf16.gmra.mxu0 %v256
  %v446 = vpop.f32.mrf.mxu0
  %v447 = vadd.f32 0.0, %v446
  %v448 = vpop.f32.mrf.mxu0
  %v449 = vadd.f32 0.0, %v448
  %450 = vmatmul.bf16.gmra.mxu0 %v258
  %v451 = vpop.f32.mrf.mxu0
  %v452 = vadd.f32 0.0, %v451
  %v453 = vpop.f32.mrf.mxu0
  %v454 = vadd.f32 0.0, %v453
  %455 = vmatmul.bf16.gmra.mxu0 %v260
  %v456 = vpop.f32.mrf.mxu0
  %v457 = vadd.f32 0.0, %v456
  %v458 = vpop.f32.mrf.mxu0
  %v459 = vadd.f32 0.0, %v458
  %460 = vmatmul.bf16.gmra.mxu0 %v262
  %v461 = vpop.f32.mrf.mxu0
  %v462 = vadd.f32 0.0, %v461
  %v463 = vpop.f32.mrf.mxu0
  %v464 = vadd.f32 0.0, %v463
  %465 = vmatmul.bf16.gmra.mxu0 %v264
  %v466 = vpop.f32.mrf.mxu0
  %v467 = vadd.f32 0.0, %v466
  %v468 = vpop.f32.mrf.mxu0
  %v469 = vadd.f32 0.0, %v468
  %470 = vmatmul.bf16.gmra.mxu0 %v266
  %v471 = vpop.f32.mrf.mxu0
  %v472 = vadd.f32 0.0, %v471
  %v473 = vpop.f32.mrf.mxu0
  %v474 = vadd.f32 0.0, %v473
  %475 = vmatmul.bf16.gmra.mxu0 %v268
  %v476 = vpop.f32.mrf.mxu0
  %v477 = vadd.f32 0.0, %v476
  %v478 = vpop.f32.mrf.mxu0
  %v479 = vadd.f32 0.0, %v478
  %480 = vmatmul.bf16.gmra.mxu0 %v270
  %v481 = vpop.f32.mrf.mxu0
  %v482 = vadd.f32 0.0, %v481
  %v483 = vpop.f32.mrf.mxu0
  %v484 = vadd.f32 0.0, %v483
  %485 = vmatmul.bf16.gmra.mxu0 %v272
  %v486 = vpop.f32.mrf.mxu0
  %v487 = vadd.f32 0.0, %v486
  %v488 = vpop.f32.mrf.mxu0
  %v489 = vadd.f32 0.0, %v488
  %490 = vdwg.mxu0
  %491 = vmatpush.bf16.msra.mxu0 %v385
  %492 = vmatpush.bf16.msra.mxu0 %v384
  %493 = vmatpush.bf16.msra.mxu0 %v383
  %494 = vmatpush.bf16.msra.mxu0 %v382
  %495 = vmatpush.bf16.msra.mxu0 %v381
  %496 = vmatpush.bf16.msra.mxu0 %v380
  %497 = vmatpush.bf16.msra.mxu0 %v379
  %498 = vmatpush.bf16.msra.mxu0 %v378
  %499 = vmatmul.bf16.gmra.mxu0 %v243
  %v500 = vpop.f32.mrf.mxu0
  %v501 = vadd.f32 %v412, %v500
  %v502 = vpop.f32.mrf.mxu0
  %v503 = vadd.f32 %v414, %v502
  %504 = vmatmul.bf16.gmra.mxu0 %v245
  %v505 = vpop.f32.mrf.mxu0
  %v506 = vadd.f32 %v417, %v505
  %v507 = vpop.f32.mrf.mxu0
  %v508 = vadd.f32 %v419, %v507
  %509 = vmatmul.bf16.gmra.mxu0 %v247
  %v510 = vpop.f32.mrf.mxu0
  %v511 = vadd.f32 %v422, %v510
  %v512 = vpop.f32.mrf.mxu0
  %v513 = vadd.f32 %v424, %v512
  %514 = vmatmul.bf16.gmra.mxu0 %v249
  %v515 = vpop.f32.mrf.mxu0
  %v516 = vadd.f32 %v427, %v515
  %v517 = vpop.f32.mrf.mxu0
  %v518 = vadd.f32 %v429, %v517
  %519 = vmatmul.bf16.gmra.mxu0 %v251
  %v520 = vpop.f32.mrf.mxu0
  %v521 = vadd.f32 %v432, %v520
  %v522 = vpop.f32.mrf.mxu0
  %v523 = vadd.f32 %v434, %v522
  %524 = vmatmul.bf16.gmra.mxu0 %v253
  %v525 = vpop.f32.mrf.mxu0
  %v526 = vadd.f32 %v437, %v525
  %v527 = vpop.f32.mrf.mxu0
  %v528 = vadd.f32 %v439, %v527
  %529 = vmatmul.bf16.gmra.mxu0 %v255
  %v530 = vpop.f32.mrf.mxu0
  %v531 = vadd.f32 %v442, %v530
  %v532 = vpop.f32.mrf.mxu0
  %v533 = vadd.f32 %v444, %v532
  %534 = vmatmul.bf16.gmra.mxu0 %v257
  %v535 = vpop.f32.mrf.mxu0
  %v536 = vadd.f32 %v447, %v535
  %v537 = vpop.f32.mrf.mxu0
  %v538 = vadd.f32 %v449, %v537
  %539 = vmatmul.bf16.gmra.mxu0 %v259
  %v540 = vpop.f32.mrf.mxu0
  %v541 = vadd.f32 %v452, %v540
  %v542 = vpop.f32.mrf.mxu0
  %v543 = vadd.f32 %v454, %v542
  %544 = vmatmul.bf16.gmra.mxu0 %v261
  %v545 = vpop.f32.mrf.mxu0
  %v546 = vadd.f32 %v457, %v545
  %v547 = vpop.f32.mrf.mxu0
  %v548 = vadd.f32 %v459, %v547
  %549 = vmatmul.bf16.gmra.mxu0 %v263
  %v550 = vpop.f32.mrf.mxu0
  %v551 = vadd.f32 %v462, %v550
  %v552 = vpop.f32.mrf.mxu0
  %v553 = vadd.f32 %v464, %v552
  %554 = vmatmul.bf16.gmra.mxu0 %v265
  %v555 = vpop.f32.mrf.mxu0
  %v556 = vadd.f32 %v467, %v555
  %v557 = vpop.f32.mrf.mxu0
  %v558 = vadd.f32 %v469, %v557
  %559 = vmatmul.bf16.gmra.mxu0 %v267
  %v560 = vpop.f32.mrf.mxu0
  %v561 = vadd.f32 %v472, %v560
  %v562 = vpop.f32.mrf.mxu0
  %v563 = vadd.f32 %v474, %v562
  %564 = vmatmul.bf16.gmra.mxu0 %v269
  %v565 = vpop.f32.mrf.mxu0
  %v566 = vadd.f32 %v477, %v565
  %v567 = vpop.f32.mrf.mxu0
  %v568 = vadd.f32 %v479, %v567
  %569 = vmatmul.bf16.gmra.mxu0 %v271
  %v570 = vpop.f32.mrf.mxu0
  %v571 = vadd.f32 %v482, %v570
  %v572 = vpop.f32.mrf.mxu0
  %v573 = vadd.f32 %v484, %v572
  %574 = vmatmul.bf16.gmra.mxu0 %v273
  %v575 = vpop.f32.mrf.mxu0
  %v576 = vadd.f32 %v487, %v575
  %v577 = vpop.f32.mrf.mxu0
  %v578 = vadd.f32 %v489, %v577
  %579 = vdwg.mxu0
  %v580 = vadd.f32 %v50, %v501
  %v581 = vadd.f32 %v51, %v503
  %v582 = vadd.f32 %v52, %v506
  %v583 = vadd.f32 %v53, %v508
  %v584 = vadd.f32 %v54, %v511
  %v585 = vadd.f32 %v55, %v513
  %v586 = vadd.f32 %v56, %v516
  %v587 = vadd.f32 %v57, %v518
  %v588 = vadd.f32 %v58, %v521
  %v589 = vadd.f32 %v59, %v523
  %v590 = vadd.f32 %v60, %v526
  %v591 = vadd.f32 %v61, %v528
  %v592 = vadd.f32 %v62, %v531
  %v593 = vadd.f32 %v63, %v533
  %v594 = vadd.f32 %v64, %v536
  %v595 = vadd.f32 %v65, %v538
  %v596 = vadd.f32 %v66, %v541
  %v597 = vadd.f32 %v67, %v543
  %v598 = vadd.f32 %v68, %v546
  %v599 = vadd.f32 %v69, %v548
  %v600 = vadd.f32 %v70, %v551
  %v601 = vadd.f32 %v71, %v553
  %v602 = vadd.f32 %v72, %v556
  %v603 = vadd.f32 %v73, %v558
  %v604 = vadd.f32 %v74, %v561
  %v605 = vadd.f32 %v75, %v563
  %v606 = vadd.f32 %v76, %v566
  %v607 = vadd.f32 %v77, %v568
  %v608 = vadd.f32 %v78, %v571
  %v609 = vadd.f32 %v79, %v573
  %v610 = vadd.f32 %v80, %v576
  %v611 = vadd.f32 %v81, %v578
  %612 = vst [vmem:[#allocation2] sm:$0xff] %v580
  %613 = vst [vmem:[#allocation2 + $0x8] sm:$0xff] %v581
  %614 = vst [vmem:[#allocation2 + $0x10] sm:$0xff] %v582
  %615 = vst [vmem:[#allocation2 + $0x18] sm:$0xff] %v583
  %616 = vst [vmem:[#allocation2 + $0x20] sm:$0xff] %v584
  %617 = vst [vmem:[#allocation2 + $0x28] sm:$0xff] %v585
  %618 = vst [vmem:[#allocation2 + $0x30] sm:$0xff] %v586
  %619 = vst [vmem:[#allocation2 + $0x38] sm:$0xff] %v587
  %620 = vst [vmem:[#allocation2 + $0x40] sm:$0xff] %v588
  %621 = vst [vmem:[#allocation2 + $0x48] sm:$0xff] %v589
  %622 = vst [vmem:[#allocation2 + $0x50] sm:$0xff] %v590
  %623 = vst [vmem:[#allocation2 + $0x58] sm:$0xff] %v591
  %624 = vst [vmem:[#allocation2 + $0x60] sm:$0xff] %v592
  %625 = vst [vmem:[#allocation2 + $0x68] sm:$0xff] %v593
  %626 = vst [vmem:[#allocation2 + $0x70] sm:$0xff] %v594
  %627 = vst [vmem:[#allocation2 + $0x78] sm:$0xff] %v595
  %628 = vst [vmem:[#allocation2 + $0x80] sm:$0xff] %v596
  %629 = vst [vmem:[#allocation2 + $0x88] sm:$0xff] %v597
  %630 = vst [vmem:[#allocation2 + $0x90] sm:$0xff] %v598
  %631 = vst [vmem:[#allocation2 + $0x98] sm:$0xff] %v599
  %632 = vst [vmem:[#allocation2 + $0xa0] sm:$0xff] %v600
  %633 = vst [vmem:[#allocation2 + $0xa8] sm:$0xff] %v601
  %634 = vst [vmem:[#allocation2 + $0xb0] sm:$0xff] %v602
  %635 = vst [vmem:[#allocation2 + $0xb8] sm:$0xff] %v603
  %636 = vst [vmem:[#allocation2 + $0xc0] sm:$0xff] %v604
  %637 = vst [vmem:[#allocation2 + $0xc8] sm:$0xff] %v605
  %638 = vst [vmem:[#allocation2 + $0xd0] sm:$0xff] %v606
  %639 = vst [vmem:[#allocation2 + $0xd8] sm:$0xff] %v607
  %640 = vst [vmem:[#allocation2 + $0xe0] sm:$0xff] %v608
  %641 = vst [vmem:[#allocation2 + $0xe8] sm:$0xff] %v609
  %642 = vst [vmem:[#allocation2 + $0xf0] sm:$0xff] %v610
  %643 = vst [vmem:[#allocation2 + $0xf8] sm:$0xff] %v611
  // Predicated region
  $region18: #{graph_convolution.3} parent=0 // pred_check
    %p644 = pneg %p14
  $region19: #{graph_convolution.3} parent=0 // pred_check_branch
    %646 = sbr.rel (%p644) target = $region21
  $region20: #{graph_convolution.3} parent=0 // pred_region
    %v647 = vld [vmem:[#allocation2] sm:$0xff]
    %v648 = vld [vmem:[#allocation2 + $0x8] sm:$0xff]
    %v649 = vld [vmem:[#allocation2 + $0x10] sm:$0xff]
    %v650 = vld [vmem:[#allocation2 + $0x18] sm:$0xff]
    %v651 = vld [vmem:[#allocation2 + $0x20] sm:$0xff]
    %v652 = vld [vmem:[#allocation2 + $0x28] sm:$0xff]
    %v653 = vld [vmem:[#allocation2 + $0x30] sm:$0xff]
    %v654 = vld [vmem:[#allocation2 + $0x38] sm:$0xff]
    %v655 = vld [vmem:[#allocation2 + $0x40] sm:$0xff]
    %v656 = vld [vmem:[#allocation2 + $0x48] sm:$0xff]
    %v657 = vld [vmem:[#allocation2 + $0x50] sm:$0xff]
    %v658 = vld [vmem:[#allocation2 + $0x58] sm:$0xff]
    %v659 = vld [vmem:[#allocation2 + $0x60] sm:$0xff]
    %v660 = vld [vmem:[#allocation2 + $0x68] sm:$0xff]
    %v661 = vld [vmem:[#allocation2 + $0x70] sm:$0xff]
    %v662 = vld [vmem:[#allocation2 + $0x78] sm:$0xff]
    %v663 = vld [vmem:[#allocation2 + $0x80] sm:$0xff]
    %v664 = vld [vmem:[#allocation2 + $0x88] sm:$0xff]
    %v665 = vld [vmem:[#allocation2 + $0x90] sm:$0xff]
    %v666 = vld [vmem:[#allocation2 + $0x98] sm:$0xff]
    %v667 = vld [vmem:[#allocation2 + $0xa0] sm:$0xff]
    %v668 = vld [vmem:[#allocation2 + $0xa8] sm:$0xff]
    %v669 = vld [vmem:[#allocation2 + $0xb0] sm:$0xff]
    %v670 = vld [vmem:[#allocation2 + $0xb8] sm:$0xff]
    %v671 = vld [vmem:[#allocation2 + $0xc0] sm:$0xff]
    %v672 = vld [vmem:[#allocation2 + $0xc8] sm:$0xff]
    %v673 = vld [vmem:[#allocation2 + $0xd0] sm:$0xff]
    %v674 = vld [vmem:[#allocation2 + $0xd8] sm:$0xff]
    %v675 = vld [vmem:[#allocation2 + $0xe0] sm:$0xff]
    %v676 = vld [vmem:[#allocation2 + $0xe8] sm:$0xff]
    %v677 = vld [vmem:[#allocation2 + $0xf0] sm:$0xff]
    %v678 = vld [vmem:[#allocation2 + $0xf8] sm:$0xff]
    %v679 = vld [vmem:[%s2] sm:$0x1]
    %v681 = vperm.slane %v679, 0
    %v683 = vadd.f32 %v647, %v681
    %v684 = vadd.f32 %v648, %v681
    %v685 = vadd.f32 %v649, %v681
    %v686 = vadd.f32 %v650, %v681
    %v687 = vadd.f32 %v651, %v681
    %v688 = vadd.f32 %v652, %v681
    %v689 = vadd.f32 %v653, %v681
    %v690 = vadd.f32 %v654, %v681
    %v691 = vadd.f32 %v655, %v681
    %v692 = vadd.f32 %v656, %v681
    %v693 = vadd.f32 %v657, %v681
    %v694 = vadd.f32 %v658, %v681
    %v695 = vadd.f32 %v659, %v681
    %v696 = vadd.f32 %v660, %v681
    %v697 = vadd.f32 %v661, %v681
    %v698 = vadd.f32 %v662, %v681
    %v699 = vadd.f32 %v663, %v681
    %v700 = vadd.f32 %v664, %v681
    %v701 = vadd.f32 %v665, %v681
    %v702 = vadd.f32 %v666, %v681
    %v703 = vadd.f32 %v667, %v681
    %v704 = vadd.f32 %v668, %v681
    %v705 = vadd.f32 %v669, %v681
    %v706 = vadd.f32 %v670, %v681
    %v707 = vadd.f32 %v671, %v681
    %v708 = vadd.f32 %v672, %v681
    %v709 = vadd.f32 %v673, %v681
    %v710 = vadd.f32 %v674, %v681
    %v711 = vadd.f32 %v675, %v681
    %v712 = vadd.f32 %v676, %v681
    %v713 = vadd.f32 %v677, %v681
    %v714 = vadd.f32 %v678, %v681
    %715 = vst [vmem:[%s3] sm:$0xff] %v683
    %716 = vst [vmem:[%s3 + $0x8] sm:$0xff] %v684
    %717 = vst [vmem:[%s3 + $0x10] sm:$0xff] %v685
    %718 = vst [vmem:[%s3 + $0x18] sm:$0xff] %v686
    %719 = vst [vmem:[%s3 + $0x20] sm:$0xff] %v687
    %720 = vst [vmem:[%s3 + $0x28] sm:$0xff] %v688
    %721 = vst [vmem:[%s3 + $0x30] sm:$0xff] %v689
    %722 = vst [vmem:[%s3 + $0x38] sm:$0xff] %v690
    %723 = vst [vmem:[%s3 + $0x40] sm:$0xff] %v691
    %724 = vst [vmem:[%s3 + $0x48] sm:$0xff] %v692
    %725 = vst [vmem:[%s3 + $0x50] sm:$0xff] %v693
    %726 = vst [vmem:[%s3 + $0x58] sm:$0xff] %v694
    %727 = vst [vmem:[%s3 + $0x60] sm:$0xff] %v695
    %728 = vst [vmem:[%s3 + $0x68] sm:$0xff] %v696
    %729 = vst [vmem:[%s3 + $0x70] sm:$0xff] %v697
    %730 = vst [vmem:[%s3 + $0x78] sm:$0xff] %v698
    %731 = vst [vmem:[%s3 + $0x80] sm:$0xff] %v699
    %732 = vst [vmem:[%s3 + $0x88] sm:$0xff] %v700
    %733 = vst [vmem:[%s3 + $0x90] sm:$0xff] %v701
    %734 = vst [vmem:[%s3 + $0x98] sm:$0xff] %v702
    %735 = vst [vmem:[%s3 + $0xa0] sm:$0xff] %v703
    %736 = vst [vmem:[%s3 + $0xa8] sm:$0xff] %v704
    %737 = vst [vmem:[%s3 + $0xb0] sm:$0xff] %v705
    %738 = vst [vmem:[%s3 + $0xb8] sm:$0xff] %v706
    %739 = vst [vmem:[%s3 + $0xc0] sm:$0xff] %v707
    %740 = vst [vmem:[%s3 + $0xc8] sm:$0xff] %v708
    %741 = vst [vmem:[%s3 + $0xd0] sm:$0xff] %v709
    %742 = vst [vmem:[%s3 + $0xd8] sm:$0xff] %v710
    %743 = vst [vmem:[%s3 + $0xe0] sm:$0xff] %v711
    %744 = vst [vmem:[%s3 + $0xe8] sm:$0xff] %v712
    %745 = vst [vmem:[%s3 + $0xf0] sm:$0xff] %v713
    %746 = vst [vmem:[%s3 + $0xf8] sm:$0xff] %v714
  $region21: #{graph_convolution.3} parent=0 // pred_fallthru
    _
  // Predicated region
  $region22: #{graph_convolution.3} parent=0 // pred_check
    _
  $region23: #{graph_convolution.3} parent=0 // pred_check_branch
    %748 = sbr.rel (0) target = $region25
  $region24: #{graph_convolution.3} parent=0 // pred_region
    _
  $region25: #{graph_convolution.3} parent=0 // pred_fallthru
    _
  // Predicated region
  $region26: #{graph_convolution.3} parent=0 // pred_check
    _
  $region27: #{graph_convolution.3} parent=0 // pred_check_branch
    %750 = sbr.rel (0) target = $region29
  $region28: #{graph_convolution.3} parent=0 // pred_region
    _
  $region29: #{graph_convolution.3} parent=0 // pred_fallthru
    _

</llo_original>
